<compile_context>
chip_gen: v7x
topology: tpu7x:2x2x1
jax: 0.10.0
libtpu: 0.0.40
codegen_flags: <defaults>
</compile_context>

<pallas_src>
import functools

import jax
import jax.numpy as jnp
from jax.experimental import pallas as pl
from jax.experimental.pallas import tpu as pltpu


def wave_kernel(params_ref, x_ref, o_ref, *, n):
    """One grid step: (TB, H, WB) input block -> (TB, H // 2**n, WB) output block.

    params_ref : SMEM f32[2**n + 1]  -- composite coeffs c[0..2**n-1], then bias
    x_ref      : VMEM (TB, H, WB)
    o_ref      : VMEM (TB, H_out, WB)
    """
    stride = 1 << n
    h_out = o_ref.shape[1]
    # One pass over the input: 2**n sublane-strided reads, weighted sum in vregs.
    acc = params_ref[0] * x_ref[:, pl.ds(0, h_out, stride=stride), :]
    for k in range(1, stride):
        acc = acc + params_ref[k] * x_ref[:, pl.ds(k, h_out, stride=stride), :]
    # Single lane-dense store.
    o_ref[...] = (acc + params_ref[stride]).astype(o_ref.dtype)


def _collapse_params(weights, biases):
    """Fold n layers of (w0, w1, bias) into c[2**n] and an accumulated bias.

    Bit i of index k selects layer i's weight (0 -> w0_i, 1 -> w1_i):
        c = kron(w_{n-1}, ..., w_1, w_0)
        b_tot = sum_i b_i * prod_{j>i} (w0_j + w1_j)
    Rounding order differs slightly from the sequential composition (within fp32 tol).
    """
    n = int(weights.shape[0])
    w = weights.astype(jnp.float32)
    b = biases.astype(jnp.float32)
    c = jnp.ones((1,), jnp.float32)
    for i in range(n):
        c = jnp.kron(w[i], c)
    ws = jnp.sum(w, axis=1)  # per-layer (w0 + w1)
    b_tot = jnp.zeros((), jnp.float32)
    for i in range(n):
        b_tot = b_tot + b[i] * jnp.prod(ws[i + 1:])
    return jnp.concatenate([c, b_tot[None]])  # (2**n + 1,), flat for cheap SMEM


def wave_layer_pallas(x, weights, biases, *, target_block_bytes=2 << 20):
    """x: (B, 1, H, W); weights: (n, 2); biases: (n,). Returns (B, 1, H // 2**n, W)."""
    B, C, H, W = x.shape
    assert C == 1, "WaveLayer convs are Conv2d(1, 1, ...)"
    n = int(weights.shape[0])
    stride = 1 << n
    h_out = H // stride  # floor semantics at every layer == single floor-div by 2**n
    assert h_out >= 1, "H too small to survive n halvings"

    params = _collapse_params(weights, biases)
    x3 = x[:, 0]  # (B, H, W)

    # --- W tiling (lane axis): only when large and 128-aligned -----------------
    if W % 128 == 0 and W > 2048:
        wb = 2048
        while W % wb != 0:
            wb -= 128
    else:
        wb = W
    grid_w = W // wb

    # --- batch tiling: ~target_block_bytes per input block ---------------------
    # (2 MiB default keeps (in x2 bufs + out x2 bufs) well inside v7x's 32 MiB
    #  scoped-VMEM default; v5e/v6e have even more headroom.)
    bytes_per_sample = H * wb * x.dtype.itemsize
    tb = int(max(1, min(B, target_block_bytes // max(bytes_per_sample, 1))))
    while B % tb != 0:
        tb -= 1
    if grid_w * (B // tb) < 2 and B >= 2:  # keep both v7x TensorCores busy
        tb = max(1, tb // 2)
        while B % tb != 0:
            tb -= 1
    grid_b = B // tb

    out = pl.pallas_call(
        functools.partial(wave_kernel, n=n),
        out_shape=jax.ShapeDtypeStruct((B, h_out, W), x.dtype),
        grid_spec=pltpu.PrefetchScalarGridSpec(
            num_scalar_prefetch=0,
            grid=(grid_b, grid_w),
            in_specs=[
                pl.BlockSpec(memory_space=pltpu.MemorySpace.SMEM),       # params
                pl.BlockSpec((tb, H, wb), lambda bi, wi: (bi, 0, wi)),   # x
            ],
            out_specs=pl.BlockSpec((tb, h_out, wb), lambda bi, wi: (bi, 0, wi)),
        ),
        compiler_params=pltpu.CompilerParams(
            dimension_semantics=("parallel", "parallel"),
        ),
    )(params, x3)

    return out[:, None, :, :]  # back to NCHW: (B, 1, H_out, W)


def wave_layer_ref(x, weights, biases):
    """Pure-JAX sequential reference matching the PyTorch module semantics."""
    y = x[:, 0]  # (B, H, W)
    for i in range(weights.shape[0]):
        h_out = y.shape[1] // 2
        even = y[:, 0 : 2 * h_out : 2, :]
        odd = y[:, 1 : 2 * h_out : 2, :]
        y = weights[i, 0] * even + weights[i, 1] * odd + biases[i]
    return y[:, None, :, :]


if __name__ == "__main__":
    key = jax.random.PRNGKey(0)
    kx, kw, kb = jax.random.split(key, 3)

    B, C, H, W = 8, 1, 16, 128  # H must survive n halvings: 16 -> 8 -> 4 -> 2
    n = 3

    x = jax.random.normal(kx, (B, C, H, W), dtype=jnp.float32)
    # Deterministic synthetic parameters (Conv2d(1,1,(2,1)) => 2 weights + 1 bias each).
    weights = 0.5 * jax.random.normal(kw, (n, 2), dtype=jnp.float32)
    biases = 0.1 * jax.random.normal(kb, (n,), dtype=jnp.float32)

    out = jax.block_until_ready(wave_layer_pallas(x, weights, biases))
    ref = wave_layer_ref(x, weights, biases)

    assert out.shape == (B, 1, H // (2 ** n), W), out.shape
    assert jnp.allclose(out, ref, atol=1e-5, rtol=1e-4), "mismatch vs reference"

    print("KERNEL_OK")
</pallas_src>

<mosaic_0001>
module attributes {stable_mosaic.version = 11 : i64} {
  func.func @wave_kernel(%arg0: i32, %arg1: i32, %arg2: memref<9xf32, #tpu.memory_space<smem>>, %arg3: memref<4x16x128xf32, #tpu.memory_space<vmem>>, %arg4: memref<4x2x128xf32, #tpu.memory_space<vmem>>) attributes {dimension_semantics = [#tpu.dimension_semantics<parallel>, #tpu.dimension_semantics<parallel>], iteration_bounds = array<i64: 2, 1>, scalar_prefetch = 0 : i64, scratch_operands = 0 : i64, tpu.core_type = #tpu.core_type<tc>, window_params = [{transform_indices = @transform_0, window_bounds = array<i64: 9>}, {transform_indices = @transform_1, window_bounds = array<i64: 4, 16, 128>}, {transform_indices = @transform_2, window_bounds = array<i64: 4, 2, 128>}]} {
    %c0 = arith.constant 0 : index
    %0 = memref.load %arg2[%c0] : memref<9xf32, #tpu.memory_space<smem>>
    %c0_0 = arith.constant 0 : index
    %c0_1 = arith.constant 0 : index
    %c0_2 = arith.constant 0 : index
    %1 = tpu.strided_load %arg3[%c0_0, %c0_1, %c0_2] {strides = array<i32: 1, 8, 1>} : memref<4x16x128xf32, #tpu.memory_space<vmem>>, vector<4x2x128xf32>
    %2 = vector.broadcast %0 : f32 to vector<4x2x128xf32>
    %3 = arith.mulf %2, %1 : vector<4x2x128xf32>
    %c1 = arith.constant 1 : index
    %4 = memref.load %arg2[%c1] : memref<9xf32, #tpu.memory_space<smem>>
    %c0_3 = arith.constant 0 : index
    %c1_4 = arith.constant 1 : index
    %c0_5 = arith.constant 0 : index
    %5 = tpu.strided_load %arg3[%c0_3, %c1_4, %c0_5] {strides = array<i32: 1, 8, 1>} : memref<4x16x128xf32, #tpu.memory_space<vmem>>, vector<4x2x128xf32>
    %6 = vector.broadcast %4 : f32 to vector<4x2x128xf32>
    %7 = arith.mulf %6, %5 : vector<4x2x128xf32>
    %8 = arith.addf %3, %7 : vector<4x2x128xf32>
    %c2 = arith.constant 2 : index
    %9 = memref.load %arg2[%c2] : memref<9xf32, #tpu.memory_space<smem>>
    %c0_6 = arith.constant 0 : index
    %c2_7 = arith.constant 2 : index
    %c0_8 = arith.constant 0 : index
    %10 = tpu.strided_load %arg3[%c0_6, %c2_7, %c0_8] {strides = array<i32: 1, 8, 1>} : memref<4x16x128xf32, #tpu.memory_space<vmem>>, vector<4x2x128xf32>
    %11 = vector.broadcast %9 : f32 to vector<4x2x128xf32>
    %12 = arith.mulf %11, %10 : vector<4x2x128xf32>
    %13 = arith.addf %8, %12 : vector<4x2x128xf32>
    %c3 = arith.constant 3 : index
    %14 = memref.load %arg2[%c3] : memref<9xf32, #tpu.memory_space<smem>>
    %c0_9 = arith.constant 0 : index
    %c3_10 = arith.constant 3 : index
    %c0_11 = arith.constant 0 : index
    %15 = tpu.strided_load %arg3[%c0_9, %c3_10, %c0_11] {strides = array<i32: 1, 8, 1>} : memref<4x16x128xf32, #tpu.memory_space<vmem>>, vector<4x2x128xf32>
    %16 = vector.broadcast %14 : f32 to vector<4x2x128xf32>
    %17 = arith.mulf %16, %15 : vector<4x2x128xf32>
    %18 = arith.addf %13, %17 : vector<4x2x128xf32>
    %c4 = arith.constant 4 : index
    %19 = memref.load %arg2[%c4] : memref<9xf32, #tpu.memory_space<smem>>
    %c0_12 = arith.constant 0 : index
    %c4_13 = arith.constant 4 : index
    %c0_14 = arith.constant 0 : index
    %20 = tpu.strided_load %arg3[%c0_12, %c4_13, %c0_14] {strides = array<i32: 1, 8, 1>} : memref<4x16x128xf32, #tpu.memory_space<vmem>>, vector<4x2x128xf32>
    %21 = vector.broadcast %19 : f32 to vector<4x2x128xf32>
    %22 = arith.mulf %21, %20 : vector<4x2x128xf32>
    %23 = arith.addf %18, %22 : vector<4x2x128xf32>
    %c5 = arith.constant 5 : index
    %24 = memref.load %arg2[%c5] : memref<9xf32, #tpu.memory_space<smem>>
    %c0_15 = arith.constant 0 : index
    %c5_16 = arith.constant 5 : index
    %c0_17 = arith.constant 0 : index
    %25 = tpu.strided_load %arg3[%c0_15, %c5_16, %c0_17] {strides = array<i32: 1, 8, 1>} : memref<4x16x128xf32, #tpu.memory_space<vmem>>, vector<4x2x128xf32>
    %26 = vector.broadcast %24 : f32 to vector<4x2x128xf32>
    %27 = arith.mulf %26, %25 : vector<4x2x128xf32>
    %28 = arith.addf %23, %27 : vector<4x2x128xf32>
    %c6 = arith.constant 6 : index
    %29 = memref.load %arg2[%c6] : memref<9xf32, #tpu.memory_space<smem>>
    %c0_18 = arith.constant 0 : index
    %c6_19 = arith.constant 6 : index
    %c0_20 = arith.constant 0 : index
    %30 = tpu.strided_load %arg3[%c0_18, %c6_19, %c0_20] {strides = array<i32: 1, 8, 1>} : memref<4x16x128xf32, #tpu.memory_space<vmem>>, vector<4x2x128xf32>
    %31 = vector.broadcast %29 : f32 to vector<4x2x128xf32>
    %32 = arith.mulf %31, %30 : vector<4x2x128xf32>
    %33 = arith.addf %28, %32 : vector<4x2x128xf32>
    %c7 = arith.constant 7 : index
    %34 = memref.load %arg2[%c7] : memref<9xf32, #tpu.memory_space<smem>>
    %c0_21 = arith.constant 0 : index
    %c7_22 = arith.constant 7 : index
    %c0_23 = arith.constant 0 : index
    %35 = tpu.strided_load %arg3[%c0_21, %c7_22, %c0_23] {strides = array<i32: 1, 8, 1>} : memref<4x16x128xf32, #tpu.memory_space<vmem>>, vector<4x2x128xf32>
    %36 = vector.broadcast %34 : f32 to vector<4x2x128xf32>
    %37 = arith.mulf %36, %35 : vector<4x2x128xf32>
    %38 = arith.addf %33, %37 : vector<4x2x128xf32>
    %c8 = arith.constant 8 : index
    %39 = memref.load %arg2[%c8] : memref<9xf32, #tpu.memory_space<smem>>
    %40 = vector.broadcast %39 : f32 to vector<4x2x128xf32>
    %41 = arith.addf %38, %40 : vector<4x2x128xf32>
    %c0_24 = arith.constant 0 : index
    %c0_25 = arith.constant 0 : index
    %c0_26 = arith.constant 0 : index
    %42 = vector.load %arg4[%c0_24, %c0_25, %c0_26] : memref<4x2x128xf32, #tpu.memory_space<vmem>>, vector<4x2x128xf32>
    tpu.vector_store %arg4[%c0_24, %c0_25, %c0_26], %41 {strides = array<i32>} : memref<4x2x128xf32, #tpu.memory_space<vmem>>, vector<4x2x128xf32>,
    return
  }
  func.func @transform_0(%arg0: i32, %arg1: i32) -> i32 {
    %c0_i32 = arith.constant 0 : i32
    %c0_i32_0 = arith.constant 0 : i32
    return %c0_i32 : i32
  }
  func.func @transform_1(%arg0: i32, %arg1: i32) -> (i32, i32, i32) {
    %c0_i32 = arith.constant 0 : i32
    %c0_i32_0 = arith.constant 0 : i32
    return %arg0, %c0_i32, %arg1 : i32, i32, i32
  }
  func.func @transform_2(%arg0: i32, %arg1: i32) -> (i32, i32, i32) {
    %c0_i32 = arith.constant 0 : i32
    %c0_i32_0 = arith.constant 0 : i32
    return %arg0, %c0_i32, %arg1 : i32, i32, i32
  }
}

</mosaic_0001>

<llo_original>
// kernel: tpu_custom_call.1
$region0: #{tpu_custom_call.1}
  #allocation0 [shape = 'u32[]', space=smem, size = 0x4, offset = 0x4, fixed_abs, tag = 'smem constant byte address 0x4 - core index']
  #allocation1 [shape = 'u32[144,128]{1,0:T(1,128)}', space=vmem, size = 0x12000, scoped, tag = 'internal scratch']
  %s0 = inlined_call_operand.hbm [shape: f32[9], index: 0, kind: input, shape index: {}]
  %s1 = inlined_call_operand.hbm [shape: f32[8,16,128], index: 1, kind: input, shape index: {}]
  %s2 = inlined_call_operand.hbm [shape: f32[8,2,128], index: 2, kind: output, shape index: {}]
  %s3 = sld [smem:[#allocation0]]
  $region49: #{tpu_custom_call.1} parent=0
    _
  %s5 = ssub.s32 1, %s3
  %s6 = scalar_select 0, %s5, %s3
  $region1: #{tpu_custom_call.1} parent=0
    #allocation2 [shape = 'u8[512]{0}', space=smem, size = 0x200, scoped, tag = 'input window, operand 0, single buffered']
    #allocation3 [shape = 's32[2]{0}', space=sflag, size = 0x8, scoped, tag = 'scoped memory for tpu_custom_call.1']
    #allocation4 [shape = 's32[2]{0}', space=sflag, size = 0x8, scoped, tag = 'scoped memory for tpu_custom_call.1']
    #allocation5 [shape = 's32[2]{0}', space=sflag, size = 0x8, scoped, tag = 'scoped memory for tpu_custom_call.1']
    #allocation6 [shape = 'u8[65536]{0}', space=vmem, size = 0x10000, scoped, tag = 'input window, operand 1']
    #allocation7 [shape = 'u8[8192]{0}', space=vmem, size = 0x2000, scoped, tag = 'output window, operand 0']
    %7 = vsyncpa [#allocation5], 0
    %8 = vsyncpa [#allocation3], 0
    %s9 = scalar_lea.sflag [#allocation3], 1
    %10 = vsyncpa %s9, 0
    %11 = vsyncpa [#allocation4], 0
    %s12 = scalar_lea.sflag [#allocation4], 1
    %13 = vsyncpa %s12, 0
    loop: start=0, step=1, limit=4
    $region2: #{tpu_custom_call.1} parent=1 // loop_pre_header
      _
    $region3: #{tpu_custom_call.1} parent=1 // loop_header
      %s15 = sphi 0, %s19
      %p16 = scmp.ge.s32.totalorder %s15, 4
      %s22 = sphi 0, %s34
      %s23 = sphi 0, %s30
      %s24 = sphi 0, %s22
      %s25 = sphi 0, %s23
      %s26 = sphi 0, %s24
      %s27 = sphi 0, %s25
      %s35 = sphi 0, %s35
      %s37 = sphi 0, %s35
      %s38 = sphi 0, %s37
      %s52 = sphi 0, %s38
      %s60 = sphi 0, %s62
      %s63 = sphi 0, %s60
      %s64 = sphi 0, %s63
      %s80 = sphi 0, %s64
      %s88 = sphi 0, %s90
      %s91 = sphi 0, %s88
      %s92 = sphi 0, %s91
      %s108 = sphi 0, %s92
    $region4: #{tpu_custom_call.1} parent=1 // loop_header_branch
      %18 = sbr.rel (%p16) target = $region8
    $region5: #{tpu_custom_call.1} parent=1 // loop_body
      %s20 = ssub.s32 %s15, 1
      %s21 = ssub.s32 %s15, 2
      %s28 = sadd.s32 1, %s23
      %p29 = scmp.ge.s32.totalorder %s28, 1
      %s30 = scalar_select %p29, 0, %s28
      %s31 = sadd.s32 1, %s22
      %s32 = scalar_select %p29, %s31, %s22
      %p33 = scmp.ge.s32.totalorder %s32, 2
      %s34 = scalar_select %p33, 0, %s32
      %s36 = sadd.s32 %s35, 1
      %p39 = scmp.eq.s32.totalorder %s15, 1
      %p40 = scmp.ne.s32.totalorder %s35, %s37
      %p41 = scmp.eq.s32.totalorder %s15, 0
      %p42 = por %p40, %p41
      %p43 = scmp.ne.s32.totalorder %s35, %s37
      %p44 = scmp.eq.s32.totalorder %s20, 1
      %p45 = por %p43, %p44
      %p46 = scmp.ne.s32.totalorder %s37, %s38
      %p47 = scmp.eq.s32.totalorder %s20, 0
      %p48 = por %p46, %p47
      %p49 = scmp.ne.s32.totalorder %s37, %s38
      %p50 = scmp.eq.s32.totalorder %s21, 1
      %p51 = por %p49, %p50
      %p53 = scmp.ne.s32.totalorder %s38, %s52
      %p54 = scmp.eq.s32.totalorder %s21, 0
      %p55 = por %p53, %p54
      %s56 = ssub.s32 %s22, %s34
      %s57 = ssub.s32 %s23, %s30
      %s58 = sor.u32 %s56, %s57
      %p59 = scmp.eq.s32.totalorder %s58, 0
      %s61 = sadd.s32 %s60, 1
      %s62 = scalar_select %p59, %s60, %s61
      %p65 = pneg %p59
      %p66 = scmp.eq.s32.totalorder %s15, 1
      %p67 = por %p65, %p66
      %p68 = scmp.ne.s32.totalorder %s60, %s63
      %p69 = scmp.eq.s32.totalorder %s15, 0
      %p70 = por %p68, %p69
      %p71 = scmp.ne.s32.totalorder %s60, %s63
      %p72 = scmp.eq.s32.totalorder %s20, 1
      %p73 = por %p71, %p72
      %p74 = scmp.ne.s32.totalorder %s63, %s64
      %p75 = scmp.eq.s32.totalorder %s20, 0
      %p76 = por %p74, %p75
      %p77 = scmp.ne.s32.totalorder %s63, %s64
      %p78 = scmp.eq.s32.totalorder %s21, 1
      %p79 = por %p77, %p78
      %p81 = scmp.ne.s32.totalorder %s64, %s80
      %p82 = scmp.eq.s32.totalorder %s21, 0
      %p83 = por %p81, %p82
      %s84 = ssub.s32 %s22, %s34
      %s85 = ssub.s32 %s23, %s30
      %s86 = sor.u32 %s84, %s85
      %p87 = scmp.eq.s32.totalorder %s86, 0
      %s89 = sadd.s32 %s88, 1
      %s90 = scalar_select %p87, %s88, %s89
      %p93 = pneg %p87
      %p94 = scmp.eq.s32.totalorder %s15, 1
      %p95 = por %p93, %p94
      %p96 = scmp.ne.s32.totalorder %s88, %s91
      %p97 = scmp.eq.s32.totalorder %s15, 0
      %p98 = por %p96, %p97
      %p99 = scmp.ne.s32.totalorder %s88, %s91
      %p100 = scmp.eq.s32.totalorder %s20, 1
      %p101 = por %p99, %p100
      %p102 = scmp.ne.s32.totalorder %s91, %s92
      %p103 = scmp.eq.s32.totalorder %s20, 0
      %p104 = por %p102, %p103
      %p105 = scmp.ne.s32.totalorder %s91, %s92
      %p106 = scmp.eq.s32.totalorder %s21, 1
      %p107 = por %p105, %p106
      %p109 = scmp.ne.s32.totalorder %s92, %s108
      %p110 = scmp.eq.s32.totalorder %s21, 0
      %p111 = por %p109, %p110
      %p112 = scmp.le.s32.totalorder 1, %s15
      %p113 = scmp.lt.s32.totalorder %s15, 3
      %p114 = pnand %p112, %p113
      %p115 = pneg %p114
      // Predicated region
      $region9: #{tpu_custom_call.1} parent=5 // pred_check
        _
      $region10: #{tpu_custom_call.1} parent=5 // pred_check_branch
        %117 = sbr.rel (%p114) target = $region12
      $region11: #{tpu_custom_call.1} parent=5 // pred_region
        %s118 = ssub.s32 %s15, 1
        // Predicated region
        $region13: #{tpu_custom_call.1} parent=11 // pred_check
          %p119 = pneg %p48
        $region14: #{tpu_custom_call.1} parent=11 // pred_check_branch
          %121 = sbr.rel (%p119) target = $region16
        $region15: #{tpu_custom_call.1} parent=11 // pred_region
          %s123 = ssub.s32 16, 16
          %124 = vsyncadd [#allocation5], %s123
          %127 = dma.hbm_to_smem %s0, 16, [#allocation2], [#allocation5]
        $region16: #{tpu_custom_call.1} parent=11 // pred_fallthru
          _
      $region12: #{tpu_custom_call.1} parent=5 // pred_fallthru
        _
      %p128 = scmp.lt.s32.totalorder %s15, 2
      // Predicated region
      $region17: #{tpu_custom_call.1} parent=5 // pred_check
        %p129 = pneg %p128
      $region18: #{tpu_custom_call.1} parent=5 // pred_check_branch
        %131 = sbr.rel (%p129) target = $region20
      $region19: #{tpu_custom_call.1} parent=5 // pred_region
        // Predicated region
        $region21: #{tpu_custom_call.1} parent=19 // pred_check
          %p132 = pneg %p70
        $region22: #{tpu_custom_call.1} parent=19 // pred_check_branch
          %134 = sbr.rel (%p132) target = $region24
        $region23: #{tpu_custom_call.1} parent=19 // pred_region
          %s135 = sand.u32 %s60, 1
          %s136 = scalar_lea.sflag [#allocation3], %s135
          %s137 = sand.u32 %s60, 1
          %s138 = smul.addr %s137, 64
          %s139 = scalar_lea.vmem [#allocation6], %s138
          %s140 = smul.u32 4, %s22
          %s142 = ssub.s32 1024, 1024
          %143 = vsyncadd %s136, %s142
          %s144 = smul.addr %s140, 2
          %s145 = sadd.s32 %s23, %s144
          %s146 = smul.addr %s145, 128
          %s147 = scalar_lea.hbm %s1, %s146
          %s148 = sshll.u32 %s139, 4
          %s149 = int_to_ptr.vmem [resolvable:$true] %s148
          %154 = dma.hbm_to_vmem [thread:$0]  %s147, 1024, %s149, %s136, 128, 128, 8
        $region24: #{tpu_custom_call.1} parent=19 // pred_fallthru
          _
      $region20: #{tpu_custom_call.1} parent=5 // pred_fallthru
        _
      %p155 = scmp.le.s32.totalorder 1, %s15
      %p156 = scmp.lt.s32.totalorder %s15, 3
      %p157 = pnand %p155, %p156
      %p158 = pneg %p157
      // Predicated region
      $region25: #{tpu_custom_call.1} parent=5 // pred_check
        _
      $region26: #{tpu_custom_call.1} parent=5 // pred_check_branch
        %160 = sbr.rel (%p157) target = $region28
      $region27: #{tpu_custom_call.1} parent=5 // pred_region
        %s161 = ssub.s32 %s15, 1
        // Predicated region
        $region29: #{tpu_custom_call.1} parent=27 // pred_check
          %p162 = pneg %p48
        $region30: #{tpu_custom_call.1} parent=27 // pred_check_branch
          %164 = sbr.rel (%p162) target = $region32
        $region31: #{tpu_custom_call.1} parent=27 // pred_region
          %165 = dma.done [#allocation5], 16
        $region32: #{tpu_custom_call.1} parent=27 // pred_fallthru
          _
        %s166 = sand.u32 %s63, 1
        %s167 = scalar_lea.sflag [#allocation3], %s166
        %s168 = sand.u32 %s63, 1
        %s169 = smul.addr %s168, 64
        %s170 = scalar_lea.vmem [#allocation6], %s169
        // Predicated region
        $region33: #{tpu_custom_call.1} parent=27 // pred_check
          %p171 = pneg %p76
        $region34: #{tpu_custom_call.1} parent=27 // pred_check_branch
          %173 = sbr.rel (%p171) target = $region36
        $region35: #{tpu_custom_call.1} parent=27 // pred_region
          %174 = dma.done %s167, 1024
        $region36: #{tpu_custom_call.1} parent=27 // pred_fallthru
          _
        %175 = sfence
        %p176 = pneg %p48
        %p177 = pneg %p45
        %s178 = sand.u32 %s63, 1
        %s179 = scalar_lea.sflag [#allocation3], %s178
        %s180 = sand.u32 %s63, 1
        %s181 = smul.addr %s180, 64
        %s182 = scalar_lea.vmem [#allocation6], %s181
        %p183 = pneg %p76
        %p184 = pneg %p73
        %p185 = pneg %p104
        %p186 = pneg %p101
        %s187 = sand.u32 %s91, 1
        %s188 = scalar_lea.sflag [#allocation4], %s187
        %s189 = sand.u32 %s91, 1
        %s190 = smul.addr %s189, 8
        %s191 = scalar_lea.vmem [#allocation7], %s190
        %s192 = smul.u32 4, %s24
        %s193 = smul.u32 4, %s24
        %s194 = sld [smem:[#allocation2]]
        %v195 = vld [vmem:[%s170] ss:$8 sm:$0x3]
        %s196 = scalar_lea.vmem %s170, 16 [#allocation6]
        %v197 = vld [vmem:[%s196] ss:$8 sm:$0x3]
        %s198 = scalar_lea.vmem %s170, 32 [#allocation6]
        %v199 = vld [vmem:[%s198] ss:$8 sm:$0x3]
        %s200 = scalar_lea.vmem %s170, 48 [#allocation6]
        %v201 = vld [vmem:[%s200] ss:$8 sm:$0x3]
        %v202 = vstv %s194
        %v203 = vmul.f32 %v202, %v195
        %v204 = vmul.f32 %v202, %v197
        %v205 = vmul.f32 %v202, %v199
        %v206 = vmul.f32 %v202, %v201
        %s207 = sld [smem:[#allocation2 + $0x1]]
        %s208 = scalar_lea.vmem %s170, 1 [#allocation6]
        %v209 = vld [vmem:[%s208] ss:$8 sm:$0x3]
        %s210 = scalar_lea.vmem %s170, 17 [#allocation6]
        %v211 = vld [vmem:[%s210] ss:$8 sm:$0x3]
        %s212 = scalar_lea.vmem %s170, 33 [#allocation6]
        %v213 = vld [vmem:[%s212] ss:$8 sm:$0x3]
        %s214 = scalar_lea.vmem %s170, 49 [#allocation6]
        %v215 = vld [vmem:[%s214] ss:$8 sm:$0x3]
        %v216 = vstv %s207
        %v217 = vmul.f32 %v216, %v209
        %v218 = vmul.f32 %v216, %v211
        %v219 = vmul.f32 %v216, %v213
        %v220 = vmul.f32 %v216, %v215
        %v221 = vadd.f32 %v203, %v217
        %v222 = vadd.f32 %v204, %v218
        %v223 = vadd.f32 %v205, %v219
        %v224 = vadd.f32 %v206, %v220
        %s225 = sld [smem:[#allocation2 + $0x2]]
        %s226 = scalar_lea.vmem %s170, 2 [#allocation6]
        %v227 = vld [vmem:[%s226] ss:$8 sm:$0x3]
        %s228 = scalar_lea.vmem %s170, 18 [#allocation6]
        %v229 = vld [vmem:[%s228] ss:$8 sm:$0x3]
        %s230 = scalar_lea.vmem %s170, 34 [#allocation6]
        %v231 = vld [vmem:[%s230] ss:$8 sm:$0x3]
        %s232 = scalar_lea.vmem %s170, 50 [#allocation6]
        %v233 = vld [vmem:[%s232] ss:$8 sm:$0x3]
        %v234 = vstv %s225
        %v235 = vmul.f32 %v234, %v227
        %v236 = vmul.f32 %v234, %v229
        %v237 = vmul.f32 %v234, %v231
        %v238 = vmul.f32 %v234, %v233
        %v239 = vadd.f32 %v221, %v235
        %v240 = vadd.f32 %v222, %v236
        %v241 = vadd.f32 %v223, %v237
        %v242 = vadd.f32 %v224, %v238
        %s243 = sld [smem:[#allocation2 + $0x3]]
        %s244 = scalar_lea.vmem %s170, 3 [#allocation6]
        %v245 = vld [vmem:[%s244] ss:$8 sm:$0x3]
        %s246 = scalar_lea.vmem %s170, 19 [#allocation6]
        %v247 = vld [vmem:[%s246] ss:$8 sm:$0x3]
        %s248 = scalar_lea.vmem %s170, 35 [#allocation6]
        %v249 = vld [vmem:[%s248] ss:$8 sm:$0x3]
        %s250 = scalar_lea.vmem %s170, 51 [#allocation6]
        %v251 = vld [vmem:[%s250] ss:$8 sm:$0x3]
        %v252 = vstv %s243
        %v253 = vmul.f32 %v252, %v245
        %v254 = vmul.f32 %v252, %v247
        %v255 = vmul.f32 %v252, %v249
        %v256 = vmul.f32 %v252, %v251
        %v257 = vadd.f32 %v239, %v253
        %v258 = vadd.f32 %v240, %v254
        %v259 = vadd.f32 %v241, %v255
        %v260 = vadd.f32 %v242, %v256
        %s261 = sld [smem:[#allocation2 + $0x4]]
        %s262 = scalar_lea.vmem %s170, 4 [#allocation6]
        %v263 = vld [vmem:[%s262] ss:$8 sm:$0x3]
        %s264 = scalar_lea.vmem %s170, 20 [#allocation6]
        %v265 = vld [vmem:[%s264] ss:$8 sm:$0x3]
        %s266 = scalar_lea.vmem %s170, 36 [#allocation6]
        %v267 = vld [vmem:[%s266] ss:$8 sm:$0x3]
        %s268 = scalar_lea.vmem %s170, 52 [#allocation6]
        %v269 = vld [vmem:[%s268] ss:$8 sm:$0x3]
        %v270 = vstv %s261
        %v271 = vmul.f32 %v270, %v263
        %v272 = vmul.f32 %v270, %v265
        %v273 = vmul.f32 %v270, %v267
        %v274 = vmul.f32 %v270, %v269
        %v275 = vadd.f32 %v257, %v271
        %v276 = vadd.f32 %v258, %v272
        %v277 = vadd.f32 %v259, %v273
        %v278 = vadd.f32 %v260, %v274
        %s279 = sld [smem:[#allocation2 + $0x5]]
        %s280 = scalar_lea.vmem %s170, 5 [#allocation6]
        %v281 = vld [vmem:[%s280] ss:$8 sm:$0x3]
        %s282 = scalar_lea.vmem %s170, 21 [#allocation6]
        %v283 = vld [vmem:[%s282] ss:$8 sm:$0x3]
        %s284 = scalar_lea.vmem %s170, 37 [#allocation6]
        %v285 = vld [vmem:[%s284] ss:$8 sm:$0x3]
        %s286 = scalar_lea.vmem %s170, 53 [#allocation6]
        %v287 = vld [vmem:[%s286] ss:$8 sm:$0x3]
        %v288 = vstv %s279
        %v289 = vmul.f32 %v288, %v281
        %v290 = vmul.f32 %v288, %v283
        %v291 = vmul.f32 %v288, %v285
        %v292 = vmul.f32 %v288, %v287
        %v293 = vadd.f32 %v275, %v289
        %v294 = vadd.f32 %v276, %v290
        %v295 = vadd.f32 %v277, %v291
        %v296 = vadd.f32 %v278, %v292
        %s297 = sld [smem:[#allocation2 + $0x6]]
        %s298 = scalar_lea.vmem %s170, 6 [#allocation6]
        %v299 = vld [vmem:[%s298] ss:$8 sm:$0x3]
        %s300 = scalar_lea.vmem %s170, 22 [#allocation6]
        %v301 = vld [vmem:[%s300] ss:$8 sm:$0x3]
        %s302 = scalar_lea.vmem %s170, 38 [#allocation6]
        %v303 = vld [vmem:[%s302] ss:$8 sm:$0x3]
        %s304 = scalar_lea.vmem %s170, 54 [#allocation6]
        %v305 = vld [vmem:[%s304] ss:$8 sm:$0x3]
        %v306 = vstv %s297
        %v307 = vmul.f32 %v306, %v299
        %v308 = vmul.f32 %v306, %v301
        %v309 = vmul.f32 %v306, %v303
        %v310 = vmul.f32 %v306, %v305
        %v311 = vadd.f32 %v293, %v307
        %v312 = vadd.f32 %v294, %v308
        %v313 = vadd.f32 %v295, %v309
        %v314 = vadd.f32 %v296, %v310
        %s315 = sld [smem:[#allocation2 + $0x7]]
        %s316 = scalar_lea.vmem %s170, 7 [#allocation6]
        %v317 = vld [vmem:[%s316] ss:$8 sm:$0x3]
        %s318 = scalar_lea.vmem %s170, 23 [#allocation6]
        %v319 = vld [vmem:[%s318] ss:$8 sm:$0x3]
        %s320 = scalar_lea.vmem %s170, 39 [#allocation6]
        %v321 = vld [vmem:[%s320] ss:$8 sm:$0x3]
        %s322 = scalar_lea.vmem %s170, 55 [#allocation6]
        %v323 = vld [vmem:[%s322] ss:$8 sm:$0x3]
        %v324 = vstv %s315
        %v325 = vmul.f32 %v324, %v317
        %v326 = vmul.f32 %v324, %v319
        %v327 = vmul.f32 %v324, %v321
        %v328 = vmul.f32 %v324, %v323
        %v329 = vadd.f32 %v311, %v325
        %v330 = vadd.f32 %v312, %v326
        %v331 = vadd.f32 %v313, %v327
        %v332 = vadd.f32 %v314, %v328
        %s333 = sld [smem:[#allocation2 + $0x8]]
        %v334 = vstv %s333
        %v335 = vadd.f32 %v329, %v334
        %v336 = vadd.f32 %v330, %v334
        %v337 = vadd.f32 %v331, %v334
        %v338 = vadd.f32 %v332, %v334
        %339 = vst [vmem:[%s191] sm:$0x3] %v335
        %340 = vst [vmem:[%s191 + $0x2] sm:$0x3] %v336
        %341 = vst [vmem:[%s191 + $0x4] sm:$0x3] %v337
        %342 = vst [vmem:[%s191 + $0x6] sm:$0x3] %v338
        %s343 = sand.u32 %s91, 1
        %s344 = scalar_lea.sflag [#allocation4], %s343
        %s345 = sand.u32 %s91, 1
        %s346 = smul.addr %s345, 8
        %s347 = scalar_lea.vmem [#allocation7], %s346
        // Predicated region
        $region37: #{tpu_custom_call.1} parent=27 // pred_check
          %p348 = pneg %p101
        $region38: #{tpu_custom_call.1} parent=27 // pred_check_branch
          %350 = sbr.rel (%p348) target = $region40
        $region39: #{tpu_custom_call.1} parent=27 // pred_region
          %s351 = smul.u32 4, %s24
          %s353 = ssub.s32 128, 128
          %354 = vsyncadd %s344, %s353
          %s355 = sadd.s32 %s25, %s351
          %s356 = smul.addr %s355, 32
          %s357 = scalar_lea.hbm %s2, %s356
          %s358 = sshll.u32 %s347, 4
          %s359 = int_to_ptr.vmem [resolvable:$true] %s358
          %364 = dma.vmem_to_hbm [thread:$0]  %s359, 128, %s357, %s344, 32, 32, 2
        $region40: #{tpu_custom_call.1} parent=27 // pred_fallthru
          _
      $region28: #{tpu_custom_call.1} parent=5 // pred_fallthru
        _
      %p365 = scmp.le.s32.totalorder 2, %s15
      // Predicated region
      $region41: #{tpu_custom_call.1} parent=5 // pred_check
        %p366 = pneg %p365
      $region42: #{tpu_custom_call.1} parent=5 // pred_check_branch
        %368 = sbr.rel (%p366) target = $region44
      $region43: #{tpu_custom_call.1} parent=5 // pred_region
        %s369 = ssub.s32 %s15, 2
        // Predicated region
        $region45: #{tpu_custom_call.1} parent=43 // pred_check
          %p370 = pneg %p107
        $region46: #{tpu_custom_call.1} parent=43 // pred_check_branch
          %372 = sbr.rel (%p370) target = $region48
        $region47: #{tpu_custom_call.1} parent=43 // pred_region
          %s373 = sand.u32 %s92, 1
          %s374 = scalar_lea.sflag [#allocation4], %s373
          %s375 = sand.u32 %s92, 1
          %s376 = smul.addr %s375, 8
          %s377 = scalar_lea.vmem [#allocation7], %s376
          %378 = dma.done %s374, 128
        $region48: #{tpu_custom_call.1} parent=43 // pred_fallthru
          _
      $region44: #{tpu_custom_call.1} parent=5 // pred_fallthru
        _
    $region6: #{tpu_custom_call.1} parent=1 // loop_footer
      %s19 = sadd.s32 1, %s15
    $region7: #{tpu_custom_call.1} parent=1 // loop_footer_branch
      %14 = sbr.rel target = $region3
    $region8: #{tpu_custom_call.1} parent=1 // loop_exit
      _
    %379 = vsyncpa [#allocation3], 1
    %s380 = scalar_lea.sflag [#allocation3], 1
    %381 = vsyncpa %s380, 1
    %382 = vsyncpa [#allocation4], 1
    %s383 = scalar_lea.sflag [#allocation4], 1
    %384 = vsyncpa %s383, 1
    %385 = vsyncpa [#allocation5], 1
    %s386 = scalar_lea.sflag [#allocation5], 1
    %387 = vsyncpa %s386, 1

</llo_original>
